<compile_context>
chip_gen: v5e
topology: v5e:2x2
jax: 0.10.0
libtpu: 0.0.40
codegen_flags: <defaults>
</compile_context>

<pallas_src>
import functools

import jax
import jax.numpy as jnp
from jax.experimental import pallas as pl
from jax.experimental.pallas import tpu as pltpu

_LANE = 128      # lane width (last dim)
_SUBLANE = 8     # f32 sublane multiple (second-to-last dim)


def _round_up(n, m):
    return ((n + m - 1) // m) * m


def _lane_pad_width(width):
    """Lane-pad only wide dims; narrow dims keep their true width (legal when
    the block's last dim equals the full array dim)."""
    if width % _LANE == 0:
        return width
    if width >= 512:
        return _round_up(width, _LANE)
    return width


def _vmem_capacity_bytes():
    try:
        return int(pltpu.get_tpu_info().vmem_capacity_bytes)
    except Exception:
        return 64 << 20   # conservative (v7x per-TensorCore)


_VMEM_CAPACITY_BYTES = _vmem_capacity_bytes()


def ae_kernel(x_ref, w1_ref, b1_ref, w2_ref, b2_ref, x1_ref, h_ref):
    # Hidden layer: x @ W1 on the MXU with f32 accumulation.  The operand cast
    # (f32 -> bf16 when enabled) happens in-kernel on the VPU so it hides under
    # the matmul instead of costing an extra HBM pass in the wrapper.
    x = x_ref[...].astype(w1_ref.dtype)
    h = jnp.dot(x, w1_ref[...], preferred_element_type=jnp.float32)
    h = jnp.maximum(h + b1_ref[...], 0.0)          # bias + ReLU epilogue in f32
    h_ref[...] = h.astype(h_ref.dtype)

    # Output layer: h @ W2 (operands in weight dtype, f32 accumulation).
    x1 = jnp.dot(h.astype(w2_ref.dtype), w2_ref[...],
                 preferred_element_type=jnp.float32)
    x1_ref[...] = (x1 + b2_ref[...]).astype(x1_ref.dtype)


def prepare_params(w1, b1, w2, b2, *, operand_dtype=None):
    """One-time parameter prep: lane-pad wide dims and optionally cast weights
    to a narrower MXU operand dtype (e.g. jnp.bfloat16 on v6e/v7x).
    Weights are stored as (in, out) = PyTorch W.T, so the kernel uses x @ W.
    Biases stay f32 (epilogue is f32).  Returns (params, (n_hidden, n_output))."""
    n_feature, n_hidden = w1.shape
    n_output = w2.shape[1]
    nh_p = _lane_pad_width(n_hidden)
    no_p = _lane_pad_width(n_output)
    w_dtype = w1.dtype if operand_dtype is None else operand_dtype

    w1_p = jnp.pad(w1, ((0, 0), (0, nh_p - n_hidden))).astype(w_dtype)
    # Padded hidden columns give ReLU(0 + 0) = 0, so padded W2 rows contribute
    # nothing to x1.
    w2_p = jnp.pad(w2, ((0, nh_p - n_hidden), (0, no_p - n_output))).astype(w_dtype)
    b1_p = jnp.pad(b1.astype(jnp.float32), (0, nh_p - n_hidden)).reshape(1, nh_p)
    b2_p = jnp.pad(b2.astype(jnp.float32), (0, no_p - n_output)).reshape(1, no_p)
    return (w1_p, b1_p, w2_p, b2_p), (n_hidden, n_output)


@functools.partial(
    jax.jit,
    static_argnames=("n_hidden", "n_output", "block_rows", "h_dtype",
                     "single_buffer_weights"))
def ae_forward(x, params, *, n_hidden, n_output, block_rows=512, h_dtype=None,
               single_buffer_weights=True):
    """x: (B, n_feature); params from prepare_params().  Returns (x1, h)
    matching AE1.forward.  block_rows caps the batch tile; the actual tile is
    derived from a per-TensorCore VMEM budget.  h_dtype=jnp.bfloat16 halves the
    h writeback stream when the caller tolerates it."""
    w1_p, b1_p, w2_p, b2_p = params
    B, n_feature = x.shape
    nh_p = w1_p.shape[1]
    no_p = w2_p.shape[1]
    out_dtype = x.dtype
    h_dt = out_dtype if h_dtype is None else jnp.dtype(h_dtype)

    # ---- batch tile & VMEM budgeting (static, trace-time arithmetic) --------
    w_itemsize = w1_p.dtype.itemsize
    weight_bufs = 1 if single_buffer_weights else 2
    weight_bytes = weight_bufs * (
        (n_feature * nh_p + nh_p * no_p) * w_itemsize + (nh_p + no_p) * 4)
    # Double-buffered per-row bytes for the pipelined activation streams.
    row_bytes = 2 * (n_feature * x.dtype.itemsize
                     + nh_p * jnp.dtype(h_dt).itemsize
                     + no_p * jnp.dtype(out_dtype).itemsize)

    budget = min((_VMEM_CAPACITY_BYTES * 3) // 4, 100 << 20)
    avail = budget - weight_bytes
    if avail > 0:
        tb_budget = max(_SUBLANE, (avail // row_bytes) // _SUBLANE * _SUBLANE)
    else:
        tb_budget = _SUBLANE   # weights barely fit; a K-tiled grid would be better
    tb = min(_round_up(block_rows, _SUBLANE), tb_budget, _round_up(B, _SUBLANE))
    tb = max(tb, _SUBLANE)

    est_bytes = weight_bytes + tb * row_bytes
    vmem_limit = int(min(max(2 * est_bytes, 32 << 20), budget))

    # Weights/biases have constant index maps -> single resident buffer.
    wkw = {"pipeline_mode": pl.Buffered(1)} if single_buffer_weights else {}

    grid = (pl.cdiv(B, tb),)   # no batch padding; last block is masked

    x1_p, h_p = pl.pallas_call(
        ae_kernel,
        out_shape=(
            jax.ShapeDtypeStruct((B, no_p), out_dtype),
            jax.ShapeDtypeStruct((B, nh_p), h_dt),
        ),
        grid=grid,
        in_specs=[
            pl.BlockSpec((tb, n_feature), lambda i: (i, 0)),
            pl.BlockSpec((n_feature, nh_p), lambda i: (0, 0), **wkw),
            pl.BlockSpec((1, nh_p), lambda i: (0, 0), **wkw),
            pl.BlockSpec((nh_p, no_p), lambda i: (0, 0), **wkw),
            pl.BlockSpec((1, no_p), lambda i: (0, 0), **wkw),
        ],
        out_specs=(
            pl.BlockSpec((tb, no_p), lambda i: (i, 0)),
            pl.BlockSpec((tb, nh_p), lambda i: (i, 0)),
        ),
        compiler_params=pltpu.CompilerParams(
            dimension_semantics=("parallel",),   # megacore-shard batch tiles
            vmem_limit_bytes=vmem_limit,
        ),
    )(x, w1_p, b1_p, w2_p, b2_p)

    # Slice only if lane padding was actually applied (wide dims).
    x1 = x1_p if no_p == n_output else x1_p[:, :n_output]
    h = h_p if nh_p == n_hidden else h_p[:, :n_hidden]
    return x1, h


def init_params(key, n_feature, n_hidden, n_output, dtype=jnp.float32):
    """Deterministic init mimicking torch.nn.Linear (uniform +/- 1/sqrt(fan_in)).
       Weights are stored as (in, out) = PyTorch W.T."""
    k1, k2, k3, k4 = jax.random.split(key, 4)
    bound1 = 1.0 / (n_feature ** 0.5)
    bound2 = 1.0 / (n_hidden ** 0.5)
    w1 = jax.random.uniform(k1, (n_feature, n_hidden), dtype, -bound1, bound1)
    b1 = jax.random.uniform(k2, (n_hidden,), dtype, -bound1, bound1)
    w2 = jax.random.uniform(k3, (n_hidden, n_output), dtype, -bound2, bound2)
    b2 = jax.random.uniform(k4, (n_output,), dtype, -bound2, bound2)
    return w1, b1, w2, b2


if __name__ == "__main__":
    n_feature, n_hidden, n_output = 32, 64, 16
    batch = 8

    key = jax.random.PRNGKey(0)
    kx, kx2, kp = jax.random.split(key, 3)
    x = jax.random.normal(kx, (batch, n_feature), dtype=jnp.float32)
    w1, b1, w2, b2 = init_params(kp, n_feature, n_hidden, n_output)

    params, (nh, no) = prepare_params(w1, b1, w2, b2)

    # Prefer single-buffered resident weights (pl.Buffered(1)); if this Pallas
    # build rejects a buffer count of 1, fall back to default double-buffering.
    try:
        x1, h = ae_forward(x, params, n_hidden=nh, n_output=no)
        jax.block_until_ready((x1, h))
        single_buf = True
    except Exception:
        single_buf = False
        x1, h = ae_forward(x, params, n_hidden=nh, n_output=no,
                           single_buffer_weights=False)
        jax.block_until_ready((x1, h))

    # Reference check in plain JAX (f32 path must match tightly).
    h_ref = jnp.maximum(x @ w1 + b1, 0.0)
    x1_ref = h_ref @ w2 + b2
    assert x1.shape == (batch, n_output) and h.shape == (batch, n_hidden)
    assert jnp.allclose(h, h_ref, atol=1e-5), "hidden mismatch (f32)"
    assert jnp.allclose(x1, x1_ref, atol=1e-5), "output mismatch (f32)"

    # Ragged batch (B not a multiple of the tile): exercises the masked last
    # block of the un-padded cdiv grid.
    xr = jax.random.normal(kx2, (batch + 5, n_feature), dtype=jnp.float32)
    x1_r, h_r = ae_forward(xr, params, n_hidden=nh, n_output=no,
                           single_buffer_weights=single_buf)
    jax.block_until_ready((x1_r, h_r))
    hr_ref = jnp.maximum(xr @ w1 + b1, 0.0)
    x1r_ref = hr_ref @ w2 + b2
    assert jnp.allclose(h_r, hr_ref, atol=1e-5), "hidden mismatch (ragged)"
    assert jnp.allclose(x1_r, x1r_ref, atol=1e-5), "output mismatch (ragged)"

    # bf16 operand path (weights pre-cast once; x cast in-kernel; f32 accum).
    params_bf16, _ = prepare_params(w1, b1, w2, b2, operand_dtype=jnp.bfloat16)
    x1_b, h_b = ae_forward(x, params_bf16, n_hidden=nh, n_output=no,
                           single_buffer_weights=single_buf)
    jax.block_until_ready((x1_b, h_b))
    assert jnp.allclose(h_b, h_ref, atol=3e-2, rtol=3e-2), "hidden mismatch (bf16)"
    assert jnp.allclose(x1_b, x1_ref, atol=3e-2, rtol=3e-2), "output mismatch (bf16)"

    print("KERNEL_OK")
</pallas_src>

<mosaic_0001>
module attributes {stable_mosaic.version = 11 : i64} {
  func.func @ae_kernel(%arg0: i32, %arg1: memref<8x32xf32, #tpu.memory_space<vmem>>, %arg2: memref<32x64xf32, #tpu.memory_space<vmem>>, %arg3: memref<1x64xf32, #tpu.memory_space<vmem>>, %arg4: memref<64x16xf32, #tpu.memory_space<vmem>>, %arg5: memref<1x16xf32, #tpu.memory_space<vmem>>, %arg6: memref<8x16xf32, #tpu.memory_space<vmem>>, %arg7: memref<8x64xf32, #tpu.memory_space<vmem>>) attributes {dimension_semantics = [#tpu.dimension_semantics<parallel>], iteration_bounds = array<i64: 1>, scalar_prefetch = 0 : i64, scratch_operands = 0 : i64, tpu.core_type = #tpu.core_type<tc>, window_params = [{transform_indices = @transform_0, window_bounds = array<i64: 8, 32>}, {pipeline_mode = #tpu.pipeline_mode<synchronous>, transform_indices = @transform_1, window_bounds = array<i64: 32, 64>}, {pipeline_mode = #tpu.pipeline_mode<synchronous>, transform_indices = @transform_2, window_bounds = array<i64: 1, 64>}, {pipeline_mode = #tpu.pipeline_mode<synchronous>, transform_indices = @transform_3, window_bounds = array<i64: 64, 16>}, {pipeline_mode = #tpu.pipeline_mode<synchronous>, transform_indices = @transform_4, window_bounds = array<i64: 1, 16>}, {transform_indices = @transform_5, window_bounds = array<i64: 8, 16>}, {transform_indices = @transform_6, window_bounds = array<i64: 8, 64>}]} {
    %c0 = arith.constant 0 : index
    %c0_0 = arith.constant 0 : index
    %0 = vector.load %arg1[%c0, %c0_0] : memref<8x32xf32, #tpu.memory_space<vmem>>, vector<8x32xf32>
    %c0_1 = arith.constant 0 : index
    %c0_2 = arith.constant 0 : index
    %1 = vector.load %arg2[%c0_1, %c0_2] : memref<32x64xf32, #tpu.memory_space<vmem>>, vector<32x64xf32>
    %cst = arith.constant dense<0.000000e+00> : vector<8x64xf32>
    %2 = tpu.matmul %0, %1, %cst {dimension_numbers = #tpu.dot_dimension_numbers<[1], [0], [0], [1], [0, 0, 1, 1], [], []>} : vector<8x32xf32>, vector<32x64xf32>, vector<8x64xf32> -> vector<8x64xf32>
    %c0_3 = arith.constant 0 : index
    %c0_4 = arith.constant 0 : index
    %3 = vector.load %arg3[%c0_3, %c0_4] : memref<1x64xf32, #tpu.memory_space<vmem>>, vector<1x64xf32>
    %4 = vector.broadcast %3 : vector<1x64xf32> to vector<8x64xf32>
    %5 = arith.addf %2, %4 : vector<8x64xf32>
    %cst_5 = arith.constant 0.000000e+00 : f32
    %6 = vector.broadcast %cst_5 : f32 to vector<8x64xf32>
    %7 = arith.maximumf %5, %6 : vector<8x64xf32>
    %c0_6 = arith.constant 0 : index
    %c0_7 = arith.constant 0 : index
    %8 = vector.load %arg7[%c0_6, %c0_7] : memref<8x64xf32, #tpu.memory_space<vmem>>, vector<8x64xf32>
    tpu.vector_store %arg7[%c0_6, %c0_7], %7 {strides = array<i32>} : memref<8x64xf32, #tpu.memory_space<vmem>>, vector<8x64xf32>,
    %c0_8 = arith.constant 0 : index
    %c0_9 = arith.constant 0 : index
    %9 = vector.load %arg4[%c0_8, %c0_9] : memref<64x16xf32, #tpu.memory_space<vmem>>, vector<64x16xf32>
    %cst_10 = arith.constant dense<0.000000e+00> : vector<8x16xf32>
    %10 = tpu.matmul %7, %9, %cst_10 {dimension_numbers = #tpu.dot_dimension_numbers<[1], [0], [0], [1], [0, 0, 1, 1], [], []>} : vector<8x64xf32>, vector<64x16xf32>, vector<8x16xf32> -> vector<8x16xf32>
    %c0_11 = arith.constant 0 : index
    %c0_12 = arith.constant 0 : index
    %11 = vector.load %arg5[%c0_11, %c0_12] : memref<1x16xf32, #tpu.memory_space<vmem>>, vector<1x16xf32>
    %12 = vector.broadcast %11 : vector<1x16xf32> to vector<8x16xf32>
    %13 = arith.addf %10, %12 : vector<8x16xf32>
    %c0_13 = arith.constant 0 : index
    %c0_14 = arith.constant 0 : index
    %14 = vector.load %arg6[%c0_13, %c0_14] : memref<8x16xf32, #tpu.memory_space<vmem>>, vector<8x16xf32>
    tpu.vector_store %arg6[%c0_13, %c0_14], %13 {strides = array<i32>} : memref<8x16xf32, #tpu.memory_space<vmem>>, vector<8x16xf32>,
    return
  }
  func.func @transform_0(%arg0: i32) -> (i32, i32) {
    %c0_i32 = arith.constant 0 : i32
    %c0_i32_0 = arith.constant 0 : i32
    return %arg0, %c0_i32 : i32, i32
  }
  func.func @transform_1(%arg0: i32) -> (i32, i32) {
    %c0_i32 = arith.constant 0 : i32
    %c0_i32_0 = arith.constant 0 : i32
    %c0_i32_1 = arith.constant 0 : i32
    return %c0_i32, %c0_i32_0 : i32, i32
  }
  func.func @transform_2(%arg0: i32) -> (i32, i32) {
    %c0_i32 = arith.constant 0 : i32
    %c0_i32_0 = arith.constant 0 : i32
    %c0_i32_1 = arith.constant 0 : i32
    return %c0_i32, %c0_i32_0 : i32, i32
  }
  func.func @transform_3(%arg0: i32) -> (i32, i32) {
    %c0_i32 = arith.constant 0 : i32
    %c0_i32_0 = arith.constant 0 : i32
    %c0_i32_1 = arith.constant 0 : i32
    return %c0_i32, %c0_i32_0 : i32, i32
  }
  func.func @transform_4(%arg0: i32) -> (i32, i32) {
    %c0_i32 = arith.constant 0 : i32
    %c0_i32_0 = arith.constant 0 : i32
    %c0_i32_1 = arith.constant 0 : i32
    return %c0_i32, %c0_i32_0 : i32, i32
  }
  func.func @transform_5(%arg0: i32) -> (i32, i32) {
    %c0_i32 = arith.constant 0 : i32
    %c0_i32_0 = arith.constant 0 : i32
    return %arg0, %c0_i32 : i32, i32
  }
  func.func @transform_6(%arg0: i32) -> (i32, i32) {
    %c0_i32 = arith.constant 0 : i32
    %c0_i32_0 = arith.constant 0 : i32
    return %arg0, %c0_i32 : i32, i32
  }
}

module attributes {stable_mosaic.version = 11 : i64} {
  func.func @ae_kernel(%arg0: i32, %arg1: memref<8x32xf32, #tpu.memory_space<vmem>>, %arg2: memref<32x64xf32, #tpu.memory_space<vmem>>, %arg3: memref<1x64xf32, #tpu.memory_space<vmem>>, %arg4: memref<64x16xf32, #tpu.memory_space<vmem>>, %arg5: memref<1x16xf32, #tpu.memory_space<vmem>>, %arg6: memref<8x16xf32, #tpu.memory_space<vmem>>, %arg7: memref<8x64xf32, #tpu.memory_space<vmem>>) attributes {dimension_semantics = [#tpu.dimension_semantics<parallel>], iteration_bounds = array<i64: 1>, scalar_prefetch = 0 : i64, scratch_operands = 0 : i64, tpu.core_type = #tpu.core_type<tc>, window_params = [{transform_indices = @transform_0, window_bounds = array<i64: 8, 32>}, {pipeline_mode = #tpu.pipeline_mode<synchronous>, transform_indices = @transform_1, window_bounds = array<i64: 32, 64>}, {pipeline_mode = #tpu.pipeline_mode<synchronous>, transform_indices = @transform_2, window_bounds = array<i64: 1, 64>}, {pipeline_mode = #tpu.pipeline_mode<synchronous>, transform_indices = @transform_3, window_bounds = array<i64: 64, 16>}, {pipeline_mode = #tpu.pipeline_mode<synchronous>, transform_indices = @transform_4, window_bounds = array<i64: 1, 16>}, {transform_indices = @transform_5, window_bounds = array<i64: 8, 16>}, {transform_indices = @transform_6, window_bounds = array<i64: 8, 64>}]} {
    %c0 = arith.constant 0 : index
    %c0_0 = arith.constant 0 : index
    %0 = vector.load %arg1[%c0, %c0_0] : memref<8x32xf32, #tpu.memory_space<vmem>>, vector<8x32xf32>
    %c0_1 = arith.constant 0 : index
    %c0_2 = arith.constant 0 : index
    %1 = vector.load %arg2[%c0_1, %c0_2] : memref<32x64xf32, #tpu.memory_space<vmem>>, vector<32x64xf32>
    %cst = arith.constant dense<0.000000e+00> : vector<8x64xf32>
    %2 = tpu.matmul %0, %1, %cst {dimension_numbers = #tpu.dot_dimension_numbers<[1], [0], [0], [1], [0, 0, 1, 1], [], []>} : vector<8x32xf32>, vector<32x64xf32>, vector<8x64xf32> -> vector<8x64xf32>
    %c0_3 = arith.constant 0 : index
    %c0_4 = arith.constant 0 : index
    %3 = vector.load %arg3[%c0_3, %c0_4] : memref<1x64xf32, #tpu.memory_space<vmem>>, vector<1x64xf32>
    %4 = vector.broadcast %3 : vector<1x64xf32> to vector<8x64xf32>
    %5 = arith.addf %2, %4 : vector<8x64xf32>
    %cst_5 = arith.constant 0.000000e+00 : f32
    %6 = vector.broadcast %cst_5 : f32 to vector<8x64xf32>
    %7 = arith.maximumf %5, %6 : vector<8x64xf32>
    %c0_6 = arith.constant 0 : index
    %c0_7 = arith.constant 0 : index
    %8 = vector.load %arg7[%c0_6, %c0_7] : memref<8x64xf32, #tpu.memory_space<vmem>>, vector<8x64xf32>
    tpu.vector_store %arg7[%c0_6, %c0_7], %7 {strides = array<i32>} : memref<8x64xf32, #tpu.memory_space<vmem>>, vector<8x64xf32>,
    %c0_8 = arith.constant 0 : index
    %c0_9 = arith.constant 0 : index
    %9 = vector.load %arg4[%c0_8, %c0_9] : memref<64x16xf32, #tpu.memory_space<vmem>>, vector<64x16xf32>
    %cst_10 = arith.constant dense<0.000000e+00> : vector<8x16xf32>
    %10 = tpu.matmul %7, %9, %cst_10 {dimension_numbers = #tpu.dot_dimension_numbers<[1], [0], [0], [1], [0, 0, 1, 1], [], []>} : vector<8x64xf32>, vector<64x16xf32>, vector<8x16xf32> -> vector<8x16xf32>
    %c0_11 = arith.constant 0 : index
    %c0_12 = arith.constant 0 : index
    %11 = vector.load %arg5[%c0_11, %c0_12] : memref<1x16xf32, #tpu.memory_space<vmem>>, vector<1x16xf32>
    %12 = vector.broadcast %11 : vector<1x16xf32> to vector<8x16xf32>
    %13 = arith.addf %10, %12 : vector<8x16xf32>
    %c0_13 = arith.constant 0 : index
    %c0_14 = arith.constant 0 : index
    %14 = vector.load %arg6[%c0_13, %c0_14] : memref<8x16xf32, #tpu.memory_space<vmem>>, vector<8x16xf32>
    tpu.vector_store %arg6[%c0_13, %c0_14], %13 {strides = array<i32>} : memref<8x16xf32, #tpu.memory_space<vmem>>, vector<8x16xf32>,
    return
  }
  func.func @transform_0(%arg0: i32) -> (i32, i32) {
    %c0_i32 = arith.constant 0 : i32
    %c0_i32_0 = arith.constant 0 : i32
    return %arg0, %c0_i32 : i32, i32
  }
  func.func @transform_1(%arg0: i32) -> (i32, i32) {
    %c0_i32 = arith.constant 0 : i32
    %c0_i32_0 = arith.constant 0 : i32
    %c0_i32_1 = arith.constant 0 : i32
    return %c0_i32, %c0_i32_0 : i32, i32
  }
  func.func @transform_2(%arg0: i32) -> (i32, i32) {
    %c0_i32 = arith.constant 0 : i32
    %c0_i32_0 = arith.constant 0 : i32
    %c0_i32_1 = arith.constant 0 : i32
    return %c0_i32, %c0_i32_0 : i32, i32
  }
  func.func @transform_3(%arg0: i32) -> (i32, i32) {
    %c0_i32 = arith.constant 0 : i32
    %c0_i32_0 = arith.constant 0 : i32
    %c0_i32_1 = arith.constant 0 : i32
    return %c0_i32, %c0_i32_0 : i32, i32
  }
  func.func @transform_4(%arg0: i32) -> (i32, i32) {
    %c0_i32 = arith.constant 0 : i32
    %c0_i32_0 = arith.constant 0 : i32
    %c0_i32_1 = arith.constant 0 : i32
    return %c0_i32, %c0_i32_0 : i32, i32
  }
  func.func @transform_5(%arg0: i32) -> (i32, i32) {
    %c0_i32 = arith.constant 0 : i32
    %c0_i32_0 = arith.constant 0 : i32
    return %arg0, %c0_i32 : i32, i32
  }
  func.func @transform_6(%arg0: i32) -> (i32, i32) {
    %c0_i32 = arith.constant 0 : i32
    %c0_i32_0 = arith.constant 0 : i32
    return %arg0, %c0_i32 : i32, i32
  }
}

</mosaic_0001>

<llo_original>
// kernel: ae_forward.1
$region0: #{ae_forward.1}
  #allocation0 [shape = 'u32[]', space=smem, size = 0x4, offset = 0x4, fixed_abs, tag = 'smem constant byte address 0x4 - core index']
  #allocation1 [shape = 'u32[72,128]{1,0:T(1,128)}', space=vmem, size = 0x9000, scoped, tag = 'internal scratch']
  %s0 = inlined_call_operand.vmem [shape: f32[8,32], index: 0, kind: input, shape index: {}]
  %s1 = inlined_call_operand.vmem [shape: f32[32,64], index: 1, kind: input, shape index: {}]
  %s2 = inlined_call_operand.vmem [shape: f32[1,64], index: 2, kind: input, shape index: {}]
  %s3 = inlined_call_operand.vmem [shape: f32[64,16], index: 3, kind: input, shape index: {}]
  %s4 = inlined_call_operand.vmem [shape: f32[1,16], index: 4, kind: input, shape index: {}]
  %s5 = inlined_call_operand.hbm [shape: f32[8,16], index: 5, kind: output, shape index: {0}]
  %s6 = inlined_call_operand.hbm [shape: f32[8,64], index: 6, kind: output, shape index: {1}]
  %7 = xla_tuple %s5, %s6
  %s8 = sld [smem:[#allocation0]]
  $region38: #{ae_forward.1} parent=0
    _
  %s10 = ssub.s32 1, %s8
  %s11 = scalar_select 0, %s10, %s8
  $region1: #{ae_forward.1} parent=0
    #allocation2 [shape = 'u8[4096]{0}', space=vmem, size = 0x1000, scoped, tag = 'output window, operand 0, single buffered']
    #allocation3 [shape = 's32[1]{0}', space=sflag, size = 0x4, scoped, tag = 'scoped memory for ae_forward.1']
    #allocation4 [shape = 'u8[4096]{0}', space=vmem, size = 0x1000, scoped, tag = 'output window, operand 1, single buffered']
    #allocation5 [shape = 's32[1]{0}', space=sflag, size = 0x4, scoped, tag = 'scoped memory for ae_forward.1']
    %12 = vsyncpa [#allocation3], 0
    %13 = vsyncpa [#allocation5], 0
    // Predicated region
    $region2: #{ae_forward.1} parent=1 // pred_check
      _
    $region3: #{ae_forward.1} parent=1 // pred_check_branch
      %15 = sbr.rel (0) target = $region5
    $region4: #{ae_forward.1} parent=1 // pred_region
      _
    $region5: #{ae_forward.1} parent=1 // pred_fallthru
      _
    // Predicated region
    $region6: #{ae_forward.1} parent=1 // pred_check
      _
    $region7: #{ae_forward.1} parent=1 // pred_check_branch
      %17 = sbr.rel (0) target = $region9
    $region8: #{ae_forward.1} parent=1 // pred_region
      _
    $region9: #{ae_forward.1} parent=1 // pred_fallthru
      _
    // Predicated region
    $region10: #{ae_forward.1} parent=1 // pred_check
      _
    $region11: #{ae_forward.1} parent=1 // pred_check_branch
      %19 = sbr.rel (0) target = $region13
    $region12: #{ae_forward.1} parent=1 // pred_region
      _
    $region13: #{ae_forward.1} parent=1 // pred_fallthru
      _
    // Predicated region
    $region14: #{ae_forward.1} parent=1 // pred_check
      _
    $region15: #{ae_forward.1} parent=1 // pred_check_branch
      %21 = sbr.rel (0) target = $region17
    $region16: #{ae_forward.1} parent=1 // pred_region
      _
    $region17: #{ae_forward.1} parent=1 // pred_fallthru
      _
    // Predicated region
    $region18: #{ae_forward.1} parent=1 // pred_check
      _
    $region19: #{ae_forward.1} parent=1 // pred_check_branch
      %23 = sbr.rel (0) target = $region21
    $region20: #{ae_forward.1} parent=1 // pred_region
      _
    $region21: #{ae_forward.1} parent=1 // pred_fallthru
      _
    %v24 = vld [vmem:[%s0] sm:$0xff]
    %v25 = vld [vmem:[%s1] sm:$0xff]
    %v26 = vld [vmem:[%s1 + $0x8] sm:$0xff]
    %v27 = vld [vmem:[%s1 + $0x10] sm:$0xff]
    %v28 = vld [vmem:[%s1 + $0x18] sm:$0xff]
    %v29 = vld [vmem:[%s2] sm:$0x1]
    %v31 = vperm.slane %v29, 0
    %vm33 = vcmask 261120
    %v35 = vsel %vm33, %v24, 0
    %37 = vmatpush.msra.mxu0 0.0
    %38 = vmatpush.msra.mxu0 0.0
    %39 = vmatpush.msra.mxu0 0.0
    %40 = vmatpush.msra.mxu0 0.0
    %41 = vmatpush.msra.mxu0 0.0
    %42 = vmatpush.msra.mxu0 0.0
    %43 = vmatpush.msra.mxu0 0.0
    %44 = vmatpush.msra.mxu0 0.0
    %45 = vmatpush.msra.mxu0 0.0
    %46 = vmatpush.msra.mxu0 0.0
    %47 = vmatpush.msra.mxu0 0.0
    %48 = vmatpush.msra.mxu0 0.0
    %49 = vmatpush.msra.mxu0 %v28
    %50 = vmatpush.msra.mxu0 %v27
    %51 = vmatpush.msra.mxu0 %v26
    %52 = vmatpush.msra.mxu0 %v25
    %53 = vmatmul.f32.gmra.mxu0 %v35
    %v54 = vpop.f32.mrf.mxu0
    %v55 = vadd.f32 %v31, %v54
    %56 = vdwg.mxu0
    %v57 = vmax.f32 %v55, 0.0
    %vm58 = vcmask 523264
    %59 = vst.msk [vmem:[#allocation4] sm:$0xff] %vm58, %v57
    %v60 = vld [vmem:[%s3] sm:$0xff]
    %v61 = vld [vmem:[%s3 + $0x8] sm:$0xff]
    %v62 = vld [vmem:[%s3 + $0x10] sm:$0xff]
    %v63 = vld [vmem:[%s3 + $0x18] sm:$0xff]
    %v64 = vld [vmem:[%s3 + $0x20] sm:$0xff]
    %v65 = vld [vmem:[%s3 + $0x28] sm:$0xff]
    %v66 = vld [vmem:[%s3 + $0x30] sm:$0xff]
    %v67 = vld [vmem:[%s3 + $0x38] sm:$0xff]
    %v68 = vld [vmem:[%s4] sm:$0x1]
    %v70 = vperm.slane %v68, 0
    %v73 = vsel %vm58, %v57, 0
    %75 = vmatpush.msra.mxu0 0.0
    %76 = vmatpush.msra.mxu0 0.0
    %77 = vmatpush.msra.mxu0 0.0
    %78 = vmatpush.msra.mxu0 0.0
    %79 = vmatpush.msra.mxu0 0.0
    %80 = vmatpush.msra.mxu0 0.0
    %81 = vmatpush.msra.mxu0 0.0
    %82 = vmatpush.msra.mxu0 0.0
    %83 = vmatpush.msra.mxu0 %v67
    %84 = vmatpush.msra.mxu0 %v66
    %85 = vmatpush.msra.mxu0 %v65
    %86 = vmatpush.msra.mxu0 %v64
    %87 = vmatpush.msra.mxu0 %v63
    %88 = vmatpush.msra.mxu0 %v62
    %89 = vmatpush.msra.mxu0 %v61
    %90 = vmatpush.msra.mxu0 %v60
    %91 = vmatmul.f32.gmra.mxu0 %v73
    %v92 = vpop.f32.mrf.mxu0
    %v93 = vadd.f32 %v70, %v92
    %94 = vdwg.mxu0
    %vm95 = vcmask 130048
    %96 = vst.msk [vmem:[#allocation2] sm:$0xff] %vm95, %v93
    // Predicated region
    $region22: #{ae_forward.1} parent=1 // pred_check
      _
    $region23: #{ae_forward.1} parent=1 // pred_check_branch
      %98 = sbr.rel (0) target = $region25
    $region24: #{ae_forward.1} parent=1 // pred_region
      %100 = vsyncadd [#allocation3], 0
      %s102 = sshll.u32 [#allocation2], 4
      %s103 = int_to_ptr.vmem [resolvable:$true] %s102
      %s104 = sshll.u32 %s5, 4
      %s105 = int_to_ptr.hbm [resolvable:$true] %s104
      %107 = dma.vmem_to_hbm [thread:$0]  %s103, 128, %s105, [#allocation3]
    $region25: #{ae_forward.1} parent=1 // pred_fallthru
      _
    // Predicated region
    $region26: #{ae_forward.1} parent=1 // pred_check
      _
    $region27: #{ae_forward.1} parent=1 // pred_check_branch
      %109 = sbr.rel (0) target = $region29
    $region28: #{ae_forward.1} parent=1 // pred_region
      %111 = vsyncadd [#allocation5], 0
      %s113 = sshll.u32 [#allocation4], 4
      %s114 = int_to_ptr.vmem [resolvable:$true] %s113
      %s115 = sshll.u32 %s6, 4
      %s116 = int_to_ptr.hbm [resolvable:$true] %s115
      %118 = dma.vmem_to_hbm [thread:$0]  %s114, 128, %s116, [#allocation5]
    $region29: #{ae_forward.1} parent=1 // pred_fallthru
      _
    // Predicated region
    $region30: #{ae_forward.1} parent=1 // pred_check
      _
    $region31: #{ae_forward.1} parent=1 // pred_check_branch
      %120 = sbr.rel (0) target = $region33
    $region32: #{ae_forward.1} parent=1 // pred_region
      %122 = dma.done [#allocation3], 128
    $region33: #{ae_forward.1} parent=1 // pred_fallthru
      _
    // Predicated region
    $region34: #{ae_forward.1} parent=1 // pred_check
      _
    $region35: #{ae_forward.1} parent=1 // pred_check_branch
      %124 = sbr.rel (0) target = $region37
    $region36: #{ae_forward.1} parent=1 // pred_region
      %126 = dma.done [#allocation5], 128
    $region37: #{ae_forward.1} parent=1 // pred_fallthru
      _
    %127 = vsyncpa [#allocation3], 1
    %128 = vsyncpa [#allocation5], 1

// kernel: ae_forward.1
$region0: #{ae_forward.1}
  #allocation0 [shape = 'u32[]', space=smem, size = 0x4, offset = 0x4, fixed_abs, tag = 'smem constant byte address 0x4 - core index']
  #allocation1 [shape = 'u32[72,128]{1,0:T(1,128)}', space=vmem, size = 0x9000, scoped, tag = 'internal scratch']
  %s0 = inlined_call_operand.vmem [shape: f32[8,32], index: 0, kind: input, shape index: {}]
  %s1 = inlined_call_operand.vmem [shape: f32[32,64], index: 1, kind: input, shape index: {}]
  %s2 = inlined_call_operand.vmem [shape: f32[1,64], index: 2, kind: input, shape index: {}]
  %s3 = inlined_call_operand.vmem [shape: f32[64,16], index: 3, kind: input, shape index: {}]
  %s4 = inlined_call_operand.vmem [shape: f32[1,16], index: 4, kind: input, shape index: {}]
  %s5 = inlined_call_operand.hbm [shape: f32[8,16], index: 5, kind: output, shape index: {0}]
  %s6 = inlined_call_operand.hbm [shape: f32[8,64], index: 6, kind: output, shape index: {1}]
  %7 = xla_tuple %s5, %s6
  %s8 = sld [smem:[#allocation0]]
  $region38: #{ae_forward.1} parent=0
    _
  %s10 = ssub.s32 1, %s8
  %s11 = scalar_select 0, %s10, %s8
  $region1: #{ae_forward.1} parent=0
    #allocation2 [shape = 'u8[4096]{0}', space=vmem, size = 0x1000, scoped, tag = 'output window, operand 0, single buffered']
    #allocation3 [shape = 's32[1]{0}', space=sflag, size = 0x4, scoped, tag = 'scoped memory for ae_forward.1']
    #allocation4 [shape = 'u8[4096]{0}', space=vmem, size = 0x1000, scoped, tag = 'output window, operand 1, single buffered']
    #allocation5 [shape = 's32[1]{0}', space=sflag, size = 0x4, scoped, tag = 'scoped memory for ae_forward.1']
    %12 = vsyncpa [#allocation3], 0
    %13 = vsyncpa [#allocation5], 0
    // Predicated region
    $region2: #{ae_forward.1} parent=1 // pred_check
      _
    $region3: #{ae_forward.1} parent=1 // pred_check_branch
      %15 = sbr.rel (0) target = $region5
    $region4: #{ae_forward.1} parent=1 // pred_region
      _
    $region5: #{ae_forward.1} parent=1 // pred_fallthru
      _
    // Predicated region
    $region6: #{ae_forward.1} parent=1 // pred_check
      _
    $region7: #{ae_forward.1} parent=1 // pred_check_branch
      %17 = sbr.rel (0) target = $region9
    $region8: #{ae_forward.1} parent=1 // pred_region
      _
    $region9: #{ae_forward.1} parent=1 // pred_fallthru
      _
    // Predicated region
    $region10: #{ae_forward.1} parent=1 // pred_check
      _
    $region11: #{ae_forward.1} parent=1 // pred_check_branch
      %19 = sbr.rel (0) target = $region13
    $region12: #{ae_forward.1} parent=1 // pred_region
      _
    $region13: #{ae_forward.1} parent=1 // pred_fallthru
      _
    // Predicated region
    $region14: #{ae_forward.1} parent=1 // pred_check
      _
    $region15: #{ae_forward.1} parent=1 // pred_check_branch
      %21 = sbr.rel (0) target = $region17
    $region16: #{ae_forward.1} parent=1 // pred_region
      _
    $region17: #{ae_forward.1} parent=1 // pred_fallthru
      _
    // Predicated region
    $region18: #{ae_forward.1} parent=1 // pred_check
      _
    $region19: #{ae_forward.1} parent=1 // pred_check_branch
      %23 = sbr.rel (0) target = $region21
    $region20: #{ae_forward.1} parent=1 // pred_region
      _
    $region21: #{ae_forward.1} parent=1 // pred_fallthru
      _
    %v24 = vld [vmem:[%s0] sm:$0xff]
    %v25 = vld [vmem:[%s1] sm:$0xff]
    %v26 = vld [vmem:[%s1 + $0x8] sm:$0xff]
    %v27 = vld [vmem:[%s1 + $0x10] sm:$0xff]
    %v28 = vld [vmem:[%s1 + $0x18] sm:$0xff]
    %v29 = vld [vmem:[%s2] sm:$0x1]
    %v31 = vperm.slane %v29, 0
    %vm33 = vcmask 261120
    %v35 = vsel %vm33, %v24, 0
    %37 = vmatpush.msra.mxu0 0.0
    %38 = vmatpush.msra.mxu0 0.0
    %39 = vmatpush.msra.mxu0 0.0
    %40 = vmatpush.msra.mxu0 0.0
    %41 = vmatpush.msra.mxu0 0.0
    %42 = vmatpush.msra.mxu0 0.0
    %43 = vmatpush.msra.mxu0 0.0
    %44 = vmatpush.msra.mxu0 0.0
    %45 = vmatpush.msra.mxu0 0.0
    %46 = vmatpush.msra.mxu0 0.0
    %47 = vmatpush.msra.mxu0 0.0
    %48 = vmatpush.msra.mxu0 0.0
    %49 = vmatpush.msra.mxu0 %v28
    %50 = vmatpush.msra.mxu0 %v27
    %51 = vmatpush.msra.mxu0 %v26
    %52 = vmatpush.msra.mxu0 %v25
    %53 = vmatmul.f32.gmra.mxu0 %v35
    %v54 = vpop.f32.mrf.mxu0
    %v55 = vadd.f32 %v31, %v54
    %56 = vdwg.mxu0
    %v57 = vmax.f32 %v55, 0.0
    %vm58 = vcmask 523264
    %59 = vst.msk [vmem:[#allocation4] sm:$0xff] %vm58, %v57
    %v60 = vld [vmem:[%s3] sm:$0xff]
    %v61 = vld [vmem:[%s3 + $0x8] sm:$0xff]
    %v62 = vld [vmem:[%s3 + $0x10] sm:$0xff]
    %v63 = vld [vmem:[%s3 + $0x18] sm:$0xff]
    %v64 = vld [vmem:[%s3 + $0x20] sm:$0xff]
    %v65 = vld [vmem:[%s3 + $0x28] sm:$0xff]
    %v66 = vld [vmem:[%s3 + $0x30] sm:$0xff]
    %v67 = vld [vmem:[%s3 + $0x38] sm:$0xff]
    %v68 = vld [vmem:[%s4] sm:$0x1]
    %v70 = vperm.slane %v68, 0
    %v73 = vsel %vm58, %v57, 0
    %75 = vmatpush.msra.mxu0 0.0
    %76 = vmatpush.msra.mxu0 0.0
    %77 = vmatpush.msra.mxu0 0.0
    %78 = vmatpush.msra.mxu0 0.0
    %79 = vmatpush.msra.mxu0 0.0
    %80 = vmatpush.msra.mxu0 0.0
    %81 = vmatpush.msra.mxu0 0.0
    %82 = vmatpush.msra.mxu0 0.0
    %83 = vmatpush.msra.mxu0 %v67
    %84 = vmatpush.msra.mxu0 %v66
    %85 = vmatpush.msra.mxu0 %v65
    %86 = vmatpush.msra.mxu0 %v64
    %87 = vmatpush.msra.mxu0 %v63
    %88 = vmatpush.msra.mxu0 %v62
    %89 = vmatpush.msra.mxu0 %v61
    %90 = vmatpush.msra.mxu0 %v60
    %91 = vmatmul.f32.gmra.mxu0 %v73
    %v92 = vpop.f32.mrf.mxu0
    %v93 = vadd.f32 %v70, %v92
    %94 = vdwg.mxu0
    %vm95 = vcmask 130048
    %96 = vst.msk [vmem:[#allocation2] sm:$0xff] %vm95, %v93
    // Predicated region
    $region22: #{ae_forward.1} parent=1 // pred_check
      _
    $region23: #{ae_forward.1} parent=1 // pred_check_branch
      %98 = sbr.rel (0) target = $region25
    $region24: #{ae_forward.1} parent=1 // pred_region
      %100 = vsyncadd [#allocation3], 0
      %s102 = sshll.u32 [#allocation2], 4
      %s103 = int_to_ptr.vmem [resolvable:$true] %s102
      %s104 = sshll.u32 %s5, 4
      %s105 = int_to_ptr.hbm [resolvable:$true] %s104
      %107 = dma.vmem_to_hbm [thread:$0]  %s103, 128, %s105, [#allocation3]
    $region25: #{ae_forward.1} parent=1 // pred_fallthru
      _
    // Predicated region
    $region26: #{ae_forward.1} parent=1 // pred_check
      _
    $region27: #{ae_forward.1} parent=1 // pred_check_branch
      %109 = sbr.rel (0) target = $region29
    $region28: #{ae_forward.1} parent=1 // pred_region
      %111 = vsyncadd [#allocation5], 0
      %s113 = sshll.u32 [#allocation4], 4
      %s114 = int_to_ptr.vmem [resolvable:$true] %s113
      %s115 = sshll.u32 %s6, 4
      %s116 = int_to_ptr.hbm [resolvable:$true] %s115
      %118 = dma.vmem_to_hbm [thread:$0]  %s114, 128, %s116, [#allocation5]
    $region29: #{ae_forward.1} parent=1 // pred_fallthru
      _
    // Predicated region
    $region30: #{ae_forward.1} parent=1 // pred_check
      _
    $region31: #{ae_forward.1} parent=1 // pred_check_branch
      %120 = sbr.rel (0) target = $region33
    $region32: #{ae_forward.1} parent=1 // pred_region
      %122 = dma.done [#allocation3], 128
    $region33: #{ae_forward.1} parent=1 // pred_fallthru
      _
    // Predicated region
    $region34: #{ae_forward.1} parent=1 // pred_check
      _
    $region35: #{ae_forward.1} parent=1 // pred_check_branch
      %124 = sbr.rel (0) target = $region37
    $region36: #{ae_forward.1} parent=1 // pred_region
      %126 = dma.done [#allocation5], 128
    $region37: #{ae_forward.1} parent=1 // pred_fallthru
      _
    %127 = vsyncpa [#allocation3], 1
    %128 = vsyncpa [#allocation5], 1

</llo_original>
